<compile_context>
chip_gen: v7x
topology: tpu7x:2x2x1
jax: 0.10.0
libtpu: 0.0.40
codegen_flags: <defaults>
</compile_context>

<pallas_src>
import functools

import jax
import jax.numpy as jnp
from jax import lax
from jax.experimental import pallas as pl
from jax.experimental.pallas import tpu as pltpu


# ---------------------------------------------------------------------------
# Pallas kernel: fused gather+input-projection, LSTM recurrence, Linear head
# ---------------------------------------------------------------------------
def lstm_head_kernel(ids_ref,    # (T*B, 1) int32  time-major flattened token ids
                     tbl_ref,    # (V, 4H)  bf16   folded embedding @ w_ih^T (g cols pre-scaled x2)
                     whh_ref,    # (H, 4H)  bf16   w_hh^T (g cols pre-scaled x2)
                     b_ref,      # (1, 4H)  f32    b_ih + b_hh (g slice pre-scaled x2)
                     wfc_ref,    # (1, H)   f32    fc weight (row vector)
                     bfc_ref,    # (1, 1)   f32    fc bias
                     out_ref,    # (B, 1)   f32    sigmoid(fc(h_T))
                     *, T, B):
    V = tbl_ref.shape[0]
    H = whh_ref.shape[0]
    TB = T * B

    # ---- fused embedding gather + input projection: one one-hot matmul over the
    # ---- folded (V, 4H) table.  Exact select; out-of-range ids map to zeros.
    ids = ids_ref[...]                                                     # (TB, 1)
    onehot = (ids == lax.broadcasted_iota(jnp.int32, (TB, V), 1)
              ).astype(jnp.bfloat16)                                       # (TB, V)
    xg_all = jnp.dot(onehot, tbl_ref[...],
                     preferred_element_type=jnp.float32) + b_ref[...]      # (TB, 4H) f32

    whh = whh_ref[...]                                                     # (H, 4H) bf16

    h = jnp.zeros((B, H), jnp.float32)
    c = jnp.zeros((B, H), jnp.float32)

    # Serial recurrence, fully unrolled (T static & tiny).  Only h @ whh and one
    # sigmoid + one tanh(c) EUP push remain on the per-step dependency chain.
    for t in range(T):
        gates = xg_all[t * B:(t + 1) * B, :] + jnp.dot(
            h.astype(jnp.bfloat16), whh,
            preferred_element_type=jnp.float32)                            # (B, 4H) f32
        # Single full-width sigmoid push; g-gate uses tanh(x) = 2*sigmoid(2x)-1
        # (pre-activation already scaled by 2 in the weights/bias).
        s = jax.nn.sigmoid(gates)                                          # (B, 4H)
        i_g = s[:, 0 * H:1 * H]
        f_g = s[:, 1 * H:2 * H]
        g_g = 2.0 * s[:, 2 * H:3 * H] - 1.0                                # == tanh(g_pre)
        o_g = s[:, 3 * H:4 * H]
        c = f_g * c + i_g * g_g
        h = o_g * jnp.tanh(c)

    # ---- Linear(H, 1) as a lane reduction (no width-1 matmul), then sigmoid.
    logit = jnp.sum(h * wfc_ref[...], axis=-1, keepdims=True) + bfc_ref[0, 0]
    out_ref[...] = jax.nn.sigmoid(logit)


# ---------------------------------------------------------------------------
# Parameters (PyTorch layout) + one-time kernel-ready prep
# ---------------------------------------------------------------------------
def init_params(key, vocab_size, embedding_dim=32, hidden_dim=32):
    ks = jax.random.split(key, 7)
    scale = 1.0 / jnp.sqrt(jnp.float32(hidden_dim))
    u = lambda k, shape: jax.random.uniform(k, shape, jnp.float32, -scale, scale)
    return {
        "embedding": jax.random.normal(ks[0], (vocab_size, embedding_dim), jnp.float32),
        "w_ih": u(ks[1], (4 * hidden_dim, embedding_dim)),   # PyTorch nn.LSTM layout (i,f,g,o)
        "w_hh": u(ks[2], (4 * hidden_dim, hidden_dim)),
        "b_ih": u(ks[3], (4 * hidden_dim,)),
        "b_hh": u(ks[4], (4 * hidden_dim,)),
        "fc_w": u(ks[5], (1, hidden_dim)),
        "fc_b": u(ks[6], (1,)),
    }


def prepare_params(params):
    """One-time re-layout: fold emb@w_ih^T, sum biases, pre-scale the g gate by 2,
    cast MXU operands to bf16.  Keeps the per-call forward path to just the kernel."""
    H = params["w_hh"].shape[1]
    emb = params["embedding"].astype(jnp.float32)                 # (V, E)
    w_ih = params["w_ih"].astype(jnp.float32)                     # (4H, E)
    w_hh = params["w_hh"].astype(jnp.float32)                     # (4H, H)
    b = (params["b_ih"] + params["b_hh"]).astype(jnp.float32)     # (4H,)

    # Scale the g-gate (slice 2H:3H, PyTorch i,f,g,o order) pre-activation by 2
    # so the kernel can use tanh(x) = 2*sigmoid(2x) - 1 with a single sigmoid push.
    gate_scale = jnp.ones((4 * H,), jnp.float32).at[2 * H:3 * H].set(2.0)

    table = (emb @ w_ih.T) * gate_scale[None, :]                  # (V, 4H) folded gather+proj
    whh_t = w_hh.T * gate_scale[None, :]                          # (H, 4H)
    bias = (b * gate_scale).reshape(1, 4 * H)                     # f32 bias kept separate

    return {
        "table": table.astype(jnp.bfloat16),
        "whh": whh_t.astype(jnp.bfloat16),
        "b": bias,
        "wfc": params["fc_w"].reshape(1, H).astype(jnp.float32),
        "bfc": params["fc_b"].reshape(1, 1).astype(jnp.float32),
    }


# ---------------------------------------------------------------------------
# Forward pass
# ---------------------------------------------------------------------------
@jax.jit
def hate_speech_forward(prepped, token_ids):
    """token_ids: (B, T) int -> (B, 1) float32 probabilities."""
    B, T = token_ids.shape
    ids_tm = token_ids.astype(jnp.int32).T.reshape(T * B, 1)      # time-major flat ids

    vmem = pl.BlockSpec(memory_space=pltpu.MemorySpace.VMEM)
    return pl.pallas_call(
        functools.partial(lstm_head_kernel, T=T, B=B),
        out_shape=jax.ShapeDtypeStruct((B, 1), jnp.float32),
        in_specs=[vmem] * 6,
        out_specs=vmem,
    )(ids_tm, prepped["table"], prepped["whh"], prepped["b"],
      prepped["wfc"], prepped["bfc"])


# ---------------------------------------------------------------------------
# Pure-JAX f32 reference (PyTorch semantics) for a tolerance check
# ---------------------------------------------------------------------------
def reference_forward(params, token_ids):
    H = params["w_hh"].shape[1]
    x = params["embedding"][token_ids]                            # (B, T, E)
    w_ih, w_hh = params["w_ih"], params["w_hh"]
    b = params["b_ih"] + params["b_hh"]
    B, T, _ = x.shape
    h = jnp.zeros((B, H), jnp.float32)
    c = jnp.zeros((B, H), jnp.float32)
    for t in range(T):
        g = x[:, t, :] @ w_ih.T + h @ w_hh.T + b
        i_g = jax.nn.sigmoid(g[:, 0 * H:1 * H])
        f_g = jax.nn.sigmoid(g[:, 1 * H:2 * H])
        g_g = jnp.tanh(g[:, 2 * H:3 * H])
        o_g = jax.nn.sigmoid(g[:, 3 * H:4 * H])
        c = f_g * c + i_g * g_g
        h = o_g * jnp.tanh(c)
    return jax.nn.sigmoid(h @ params["fc_w"].T + params["fc_b"])


# ---------------------------------------------------------------------------
if __name__ == "__main__":
    vocab_size = 16          # reference word2index only has <PAD>/<UNK>; use a small toy vocab
    embedding_dim = 32
    hidden_dim = 32
    batch, seq = 8, 8

    key = jax.random.PRNGKey(0)
    pkey, dkey = jax.random.split(key)
    params = init_params(pkey, vocab_size, embedding_dim, hidden_dim)
    prepped = prepare_params(params)

    token_ids = jax.random.randint(dkey, (batch, seq), 0, vocab_size, dtype=jnp.int32)

    probs = hate_speech_forward(prepped, token_ids)
    probs = jax.block_until_ready(probs)

    assert probs.shape == (batch, 1)
    assert bool(jnp.all((probs >= 0.0) & (probs <= 1.0)))

    # bf16 MXU operands => not bit-exact vs f32 reference; loose tolerance.
    ref = reference_forward(params, token_ids)
    assert bool(jnp.max(jnp.abs(probs - ref)) < 5e-2), "mismatch vs f32 reference"

    print("KERNEL_OK")
</pallas_src>

<mosaic_0001>
module attributes {stable_mosaic.version = 11 : i64} {
  func.func @lstm_head_kernel(%arg0: memref<64x1xi32, #tpu.memory_space<vmem>>, %arg1: memref<16x128xbf16, #tpu.memory_space<vmem>>, %arg2: memref<32x128xbf16, #tpu.memory_space<vmem>>, %arg3: memref<1x128xf32, #tpu.memory_space<vmem>>, %arg4: memref<1x32xf32, #tpu.memory_space<vmem>>, %arg5: memref<1x1xf32, #tpu.memory_space<vmem>>, %arg6: memref<8x1xf32, #tpu.memory_space<vmem>>) attributes {dimension_semantics = [], scalar_prefetch = 0 : i64, scratch_operands = 0 : i64, tpu.core_type = #tpu.core_type<tc>} {
    %c0 = arith.constant 0 : index
    %c0_0 = arith.constant 0 : index
    %0 = vector.load %arg0[%c0, %c0_0] : memref<64x1xi32, #tpu.memory_space<vmem>>, vector<64x1xi32>
    %1 = tpu.iota {dimensions = array<i32: 1>} : vector<64x16xi32>
    %2 = vector.broadcast %0 : vector<64x1xi32> to vector<64x16xi32>
    %3 = arith.cmpi eq, %2, %1 : vector<64x16xi32>
    %4 = arith.extui %3 : vector<64x16xi1> to vector<64x16xi32>
    %5 = arith.sitofp %4 : vector<64x16xi32> to vector<64x16xf32>
    %6 = arith.truncf %5 : vector<64x16xf32> to vector<64x16xbf16>
    %c0_1 = arith.constant 0 : index
    %c0_2 = arith.constant 0 : index
    %7 = vector.load %arg1[%c0_1, %c0_2] : memref<16x128xbf16, #tpu.memory_space<vmem>>, vector<16x128xbf16>
    %cst = arith.constant dense<0.000000e+00> : vector<64x128xf32>
    %8 = tpu.matmul %6, %7, %cst {dimension_numbers = #tpu.dot_dimension_numbers<[1], [0], [0], [1], [0, 0, 1, 1], [], []>} : vector<64x16xbf16>, vector<16x128xbf16>, vector<64x128xf32> -> vector<64x128xf32>
    %c0_3 = arith.constant 0 : index
    %c0_4 = arith.constant 0 : index
    %9 = vector.load %arg3[%c0_3, %c0_4] : memref<1x128xf32, #tpu.memory_space<vmem>>, vector<1x128xf32>
    %10 = vector.broadcast %9 : vector<1x128xf32> to vector<64x128xf32>
    %11 = arith.addf %8, %10 : vector<64x128xf32>
    %c0_5 = arith.constant 0 : index
    %c0_6 = arith.constant 0 : index
    %12 = vector.load %arg2[%c0_5, %c0_6] : memref<32x128xbf16, #tpu.memory_space<vmem>>, vector<32x128xbf16>
    %cst_7 = arith.constant 0.000000e+00 : f32
    %13 = vector.broadcast %cst_7 : f32 to vector<8x32xf32>
    %cst_8 = arith.constant 0.000000e+00 : f32
    %14 = vector.broadcast %cst_8 : f32 to vector<8x32xf32>
    %15 = vector.extract_strided_slice %11 {offsets = [0, 0], sizes = [8, 128], strides = [1, 1]} : vector<64x128xf32> to vector<8x128xf32>
    %16 = arith.truncf %13 : vector<8x32xf32> to vector<8x32xbf16>
    %cst_9 = arith.constant dense<0.000000e+00> : vector<8x128xf32>
    %17 = tpu.matmul %16, %12, %cst_9 {dimension_numbers = #tpu.dot_dimension_numbers<[1], [0], [0], [1], [0, 0, 1, 1], [], []>} : vector<8x32xbf16>, vector<32x128xbf16>, vector<8x128xf32> -> vector<8x128xf32>
    %18 = arith.addf %15, %17 : vector<8x128xf32>
    %19 = arith.negf %18 : vector<8x128xf32>
    %20 = math.exp %19 : vector<8x128xf32>
    %cst_10 = arith.constant 1.000000e+00 : f32
    %21 = vector.broadcast %cst_10 : f32 to vector<8x128xf32>
    %22 = arith.addf %21, %20 : vector<8x128xf32>
    %23 = arith.divf %21, %22 : vector<8x128xf32>
    %24 = vector.extract_strided_slice %23 {offsets = [0, 0], sizes = [8, 32], strides = [1, 1]} : vector<8x128xf32> to vector<8x32xf32>
    %25 = vector.extract_strided_slice %23 {offsets = [0, 32], sizes = [8, 32], strides = [1, 1]} : vector<8x128xf32> to vector<8x32xf32>
    %26 = vector.extract_strided_slice %23 {offsets = [0, 64], sizes = [8, 32], strides = [1, 1]} : vector<8x128xf32> to vector<8x32xf32>
    %cst_11 = arith.constant 2.000000e+00 : f32
    %27 = vector.broadcast %cst_11 : f32 to vector<8x32xf32>
    %28 = arith.mulf %27, %26 : vector<8x32xf32>
    %cst_12 = arith.constant 1.000000e+00 : f32
    %29 = vector.broadcast %cst_12 : f32 to vector<8x32xf32>
    %30 = arith.subf %28, %29 : vector<8x32xf32>
    %31 = vector.extract_strided_slice %23 {offsets = [0, 96], sizes = [8, 32], strides = [1, 1]} : vector<8x128xf32> to vector<8x32xf32>
    %32 = arith.mulf %25, %14 : vector<8x32xf32>
    %33 = arith.mulf %24, %30 : vector<8x32xf32>
    %34 = arith.addf %32, %33 : vector<8x32xf32>
    %35 = math.tanh %34 : vector<8x32xf32>
    %36 = arith.mulf %31, %35 : vector<8x32xf32>
    %37 = vector.extract_strided_slice %11 {offsets = [8, 0], sizes = [8, 128], strides = [1, 1]} : vector<64x128xf32> to vector<8x128xf32>
    %38 = arith.truncf %36 : vector<8x32xf32> to vector<8x32xbf16>
    %cst_13 = arith.constant dense<0.000000e+00> : vector<8x128xf32>
    %39 = tpu.matmul %38, %12, %cst_13 {dimension_numbers = #tpu.dot_dimension_numbers<[1], [0], [0], [1], [0, 0, 1, 1], [], []>} : vector<8x32xbf16>, vector<32x128xbf16>, vector<8x128xf32> -> vector<8x128xf32>
    %40 = arith.addf %37, %39 : vector<8x128xf32>
    %41 = arith.negf %40 : vector<8x128xf32>
    %42 = math.exp %41 : vector<8x128xf32>
    %cst_14 = arith.constant 1.000000e+00 : f32
    %43 = vector.broadcast %cst_14 : f32 to vector<8x128xf32>
    %44 = arith.addf %43, %42 : vector<8x128xf32>
    %45 = arith.divf %43, %44 : vector<8x128xf32>
    %46 = vector.extract_strided_slice %45 {offsets = [0, 0], sizes = [8, 32], strides = [1, 1]} : vector<8x128xf32> to vector<8x32xf32>
    %47 = vector.extract_strided_slice %45 {offsets = [0, 32], sizes = [8, 32], strides = [1, 1]} : vector<8x128xf32> to vector<8x32xf32>
    %48 = vector.extract_strided_slice %45 {offsets = [0, 64], sizes = [8, 32], strides = [1, 1]} : vector<8x128xf32> to vector<8x32xf32>
    %cst_15 = arith.constant 2.000000e+00 : f32
    %49 = vector.broadcast %cst_15 : f32 to vector<8x32xf32>
    %50 = arith.mulf %49, %48 : vector<8x32xf32>
    %cst_16 = arith.constant 1.000000e+00 : f32
    %51 = vector.broadcast %cst_16 : f32 to vector<8x32xf32>
    %52 = arith.subf %50, %51 : vector<8x32xf32>
    %53 = vector.extract_strided_slice %45 {offsets = [0, 96], sizes = [8, 32], strides = [1, 1]} : vector<8x128xf32> to vector<8x32xf32>
    %54 = arith.mulf %47, %34 : vector<8x32xf32>
    %55 = arith.mulf %46, %52 : vector<8x32xf32>
    %56 = arith.addf %54, %55 : vector<8x32xf32>
    %57 = math.tanh %56 : vector<8x32xf32>
    %58 = arith.mulf %53, %57 : vector<8x32xf32>
    %59 = vector.extract_strided_slice %11 {offsets = [16, 0], sizes = [8, 128], strides = [1, 1]} : vector<64x128xf32> to vector<8x128xf32>
    %60 = arith.truncf %58 : vector<8x32xf32> to vector<8x32xbf16>
    %cst_17 = arith.constant dense<0.000000e+00> : vector<8x128xf32>
    %61 = tpu.matmul %60, %12, %cst_17 {dimension_numbers = #tpu.dot_dimension_numbers<[1], [0], [0], [1], [0, 0, 1, 1], [], []>} : vector<8x32xbf16>, vector<32x128xbf16>, vector<8x128xf32> -> vector<8x128xf32>
    %62 = arith.addf %59, %61 : vector<8x128xf32>
    %63 = arith.negf %62 : vector<8x128xf32>
    %64 = math.exp %63 : vector<8x128xf32>
    %cst_18 = arith.constant 1.000000e+00 : f32
    %65 = vector.broadcast %cst_18 : f32 to vector<8x128xf32>
    %66 = arith.addf %65, %64 : vector<8x128xf32>
    %67 = arith.divf %65, %66 : vector<8x128xf32>
    %68 = vector.extract_strided_slice %67 {offsets = [0, 0], sizes = [8, 32], strides = [1, 1]} : vector<8x128xf32> to vector<8x32xf32>
    %69 = vector.extract_strided_slice %67 {offsets = [0, 32], sizes = [8, 32], strides = [1, 1]} : vector<8x128xf32> to vector<8x32xf32>
    %70 = vector.extract_strided_slice %67 {offsets = [0, 64], sizes = [8, 32], strides = [1, 1]} : vector<8x128xf32> to vector<8x32xf32>
    %cst_19 = arith.constant 2.000000e+00 : f32
    %71 = vector.broadcast %cst_19 : f32 to vector<8x32xf32>
    %72 = arith.mulf %71, %70 : vector<8x32xf32>
    %cst_20 = arith.constant 1.000000e+00 : f32
    %73 = vector.broadcast %cst_20 : f32 to vector<8x32xf32>
    %74 = arith.subf %72, %73 : vector<8x32xf32>
    %75 = vector.extract_strided_slice %67 {offsets = [0, 96], sizes = [8, 32], strides = [1, 1]} : vector<8x128xf32> to vector<8x32xf32>
    %76 = arith.mulf %69, %56 : vector<8x32xf32>
    %77 = arith.mulf %68, %74 : vector<8x32xf32>
    %78 = arith.addf %76, %77 : vector<8x32xf32>
    %79 = math.tanh %78 : vector<8x32xf32>
    %80 = arith.mulf %75, %79 : vector<8x32xf32>
    %81 = vector.extract_strided_slice %11 {offsets = [24, 0], sizes = [8, 128], strides = [1, 1]} : vector<64x128xf32> to vector<8x128xf32>
    %82 = arith.truncf %80 : vector<8x32xf32> to vector<8x32xbf16>
    %cst_21 = arith.constant dense<0.000000e+00> : vector<8x128xf32>
    %83 = tpu.matmul %82, %12, %cst_21 {dimension_numbers = #tpu.dot_dimension_numbers<[1], [0], [0], [1], [0, 0, 1, 1], [], []>} : vector<8x32xbf16>, vector<32x128xbf16>, vector<8x128xf32> -> vector<8x128xf32>
    %84 = arith.addf %81, %83 : vector<8x128xf32>
    %85 = arith.negf %84 : vector<8x128xf32>
    %86 = math.exp %85 : vector<8x128xf32>
    %cst_22 = arith.constant 1.000000e+00 : f32
    %87 = vector.broadcast %cst_22 : f32 to vector<8x128xf32>
    %88 = arith.addf %87, %86 : vector<8x128xf32>
    %89 = arith.divf %87, %88 : vector<8x128xf32>
    %90 = vector.extract_strided_slice %89 {offsets = [0, 0], sizes = [8, 32], strides = [1, 1]} : vector<8x128xf32> to vector<8x32xf32>
    %91 = vector.extract_strided_slice %89 {offsets = [0, 32], sizes = [8, 32], strides = [1, 1]} : vector<8x128xf32> to vector<8x32xf32>
    %92 = vector.extract_strided_slice %89 {offsets = [0, 64], sizes = [8, 32], strides = [1, 1]} : vector<8x128xf32> to vector<8x32xf32>
    %cst_23 = arith.constant 2.000000e+00 : f32
    %93 = vector.broadcast %cst_23 : f32 to vector<8x32xf32>
    %94 = arith.mulf %93, %92 : vector<8x32xf32>
    %cst_24 = arith.constant 1.000000e+00 : f32
    %95 = vector.broadcast %cst_24 : f32 to vector<8x32xf32>
    %96 = arith.subf %94, %95 : vector<8x32xf32>
    %97 = vector.extract_strided_slice %89 {offsets = [0, 96], sizes = [8, 32], strides = [1, 1]} : vector<8x128xf32> to vector<8x32xf32>
    %98 = arith.mulf %91, %78 : vector<8x32xf32>
    %99 = arith.mulf %90, %96 : vector<8x32xf32>
    %100 = arith.addf %98, %99 : vector<8x32xf32>
    %101 = math.tanh %100 : vector<8x32xf32>
    %102 = arith.mulf %97, %101 : vector<8x32xf32>
    %103 = vector.extract_strided_slice %11 {offsets = [32, 0], sizes = [8, 128], strides = [1, 1]} : vector<64x128xf32> to vector<8x128xf32>
    %104 = arith.truncf %102 : vector<8x32xf32> to vector<8x32xbf16>
    %cst_25 = arith.constant dense<0.000000e+00> : vector<8x128xf32>
    %105 = tpu.matmul %104, %12, %cst_25 {dimension_numbers = #tpu.dot_dimension_numbers<[1], [0], [0], [1], [0, 0, 1, 1], [], []>} : vector<8x32xbf16>, vector<32x128xbf16>, vector<8x128xf32> -> vector<8x128xf32>
    %106 = arith.addf %103, %105 : vector<8x128xf32>
    %107 = arith.negf %106 : vector<8x128xf32>
    %108 = math.exp %107 : vector<8x128xf32>
    %cst_26 = arith.constant 1.000000e+00 : f32
    %109 = vector.broadcast %cst_26 : f32 to vector<8x128xf32>
    %110 = arith.addf %109, %108 : vector<8x128xf32>
    %111 = arith.divf %109, %110 : vector<8x128xf32>
    %112 = vector.extract_strided_slice %111 {offsets = [0, 0], sizes = [8, 32], strides = [1, 1]} : vector<8x128xf32> to vector<8x32xf32>
    %113 = vector.extract_strided_slice %111 {offsets = [0, 32], sizes = [8, 32], strides = [1, 1]} : vector<8x128xf32> to vector<8x32xf32>
    %114 = vector.extract_strided_slice %111 {offsets = [0, 64], sizes = [8, 32], strides = [1, 1]} : vector<8x128xf32> to vector<8x32xf32>
    %cst_27 = arith.constant 2.000000e+00 : f32
    %115 = vector.broadcast %cst_27 : f32 to vector<8x32xf32>
    %116 = arith.mulf %115, %114 : vector<8x32xf32>
    %cst_28 = arith.constant 1.000000e+00 : f32
    %117 = vector.broadcast %cst_28 : f32 to vector<8x32xf32>
    %118 = arith.subf %116, %117 : vector<8x32xf32>
    %119 = vector.extract_strided_slice %111 {offsets = [0, 96], sizes = [8, 32], strides = [1, 1]} : vector<8x128xf32> to vector<8x32xf32>
    %120 = arith.mulf %113, %100 : vector<8x32xf32>
    %121 = arith.mulf %112, %118 : vector<8x32xf32>
    %122 = arith.addf %120, %121 : vector<8x32xf32>
    %123 = math.tanh %122 : vector<8x32xf32>
    %124 = arith.mulf %119, %123 : vector<8x32xf32>
    %125 = vector.extract_strided_slice %11 {offsets = [40, 0], sizes = [8, 128], strides = [1, 1]} : vector<64x128xf32> to vector<8x128xf32>
    %126 = arith.truncf %124 : vector<8x32xf32> to vector<8x32xbf16>
    %cst_29 = arith.constant dense<0.000000e+00> : vector<8x128xf32>
    %127 = tpu.matmul %126, %12, %cst_29 {dimension_numbers = #tpu.dot_dimension_numbers<[1], [0], [0], [1], [0, 0, 1, 1], [], []>} : vector<8x32xbf16>, vector<32x128xbf16>, vector<8x128xf32> -> vector<8x128xf32>
    %128 = arith.addf %125, %127 : vector<8x128xf32>
    %129 = arith.negf %128 : vector<8x128xf32>
    %130 = math.exp %129 : vector<8x128xf32>
    %cst_30 = arith.constant 1.000000e+00 : f32
    %131 = vector.broadcast %cst_30 : f32 to vector<8x128xf32>
    %132 = arith.addf %131, %130 : vector<8x128xf32>
    %133 = arith.divf %131, %132 : vector<8x128xf32>
    %134 = vector.extract_strided_slice %133 {offsets = [0, 0], sizes = [8, 32], strides = [1, 1]} : vector<8x128xf32> to vector<8x32xf32>
    %135 = vector.extract_strided_slice %133 {offsets = [0, 32], sizes = [8, 32], strides = [1, 1]} : vector<8x128xf32> to vector<8x32xf32>
    %136 = vector.extract_strided_slice %133 {offsets = [0, 64], sizes = [8, 32], strides = [1, 1]} : vector<8x128xf32> to vector<8x32xf32>
    %cst_31 = arith.constant 2.000000e+00 : f32
    %137 = vector.broadcast %cst_31 : f32 to vector<8x32xf32>
    %138 = arith.mulf %137, %136 : vector<8x32xf32>
    %cst_32 = arith.constant 1.000000e+00 : f32
    %139 = vector.broadcast %cst_32 : f32 to vector<8x32xf32>
    %140 = arith.subf %138, %139 : vector<8x32xf32>
    %141 = vector.extract_strided_slice %133 {offsets = [0, 96], sizes = [8, 32], strides = [1, 1]} : vector<8x128xf32> to vector<8x32xf32>
    %142 = arith.mulf %135, %122 : vector<8x32xf32>
    %143 = arith.mulf %134, %140 : vector<8x32xf32>
    %144 = arith.addf %142, %143 : vector<8x32xf32>
    %145 = math.tanh %144 : vector<8x32xf32>
    %146 = arith.mulf %141, %145 : vector<8x32xf32>
    %147 = vector.extract_strided_slice %11 {offsets = [48, 0], sizes = [8, 128], strides = [1, 1]} : vector<64x128xf32> to vector<8x128xf32>
    %148 = arith.truncf %146 : vector<8x32xf32> to vector<8x32xbf16>
    %cst_33 = arith.constant dense<0.000000e+00> : vector<8x128xf32>
    %149 = tpu.matmul %148, %12, %cst_33 {dimension_numbers = #tpu.dot_dimension_numbers<[1], [0], [0], [1], [0, 0, 1, 1], [], []>} : vector<8x32xbf16>, vector<32x128xbf16>, vector<8x128xf32> -> vector<8x128xf32>
    %150 = arith.addf %147, %149 : vector<8x128xf32>
    %151 = arith.negf %150 : vector<8x128xf32>
    %152 = math.exp %151 : vector<8x128xf32>
    %cst_34 = arith.constant 1.000000e+00 : f32
    %153 = vector.broadcast %cst_34 : f32 to vector<8x128xf32>
    %154 = arith.addf %153, %152 : vector<8x128xf32>
    %155 = arith.divf %153, %154 : vector<8x128xf32>
    %156 = vector.extract_strided_slice %155 {offsets = [0, 0], sizes = [8, 32], strides = [1, 1]} : vector<8x128xf32> to vector<8x32xf32>
    %157 = vector.extract_strided_slice %155 {offsets = [0, 32], sizes = [8, 32], strides = [1, 1]} : vector<8x128xf32> to vector<8x32xf32>
    %158 = vector.extract_strided_slice %155 {offsets = [0, 64], sizes = [8, 32], strides = [1, 1]} : vector<8x128xf32> to vector<8x32xf32>
    %cst_35 = arith.constant 2.000000e+00 : f32
    %159 = vector.broadcast %cst_35 : f32 to vector<8x32xf32>
    %160 = arith.mulf %159, %158 : vector<8x32xf32>
    %cst_36 = arith.constant 1.000000e+00 : f32
    %161 = vector.broadcast %cst_36 : f32 to vector<8x32xf32>
    %162 = arith.subf %160, %161 : vector<8x32xf32>
    %163 = vector.extract_strided_slice %155 {offsets = [0, 96], sizes = [8, 32], strides = [1, 1]} : vector<8x128xf32> to vector<8x32xf32>
    %164 = arith.mulf %157, %144 : vector<8x32xf32>
    %165 = arith.mulf %156, %162 : vector<8x32xf32>
    %166 = arith.addf %164, %165 : vector<8x32xf32>
    %167 = math.tanh %166 : vector<8x32xf32>
    %168 = arith.mulf %163, %167 : vector<8x32xf32>
    %169 = vector.extract_strided_slice %11 {offsets = [56, 0], sizes = [8, 128], strides = [1, 1]} : vector<64x128xf32> to vector<8x128xf32>
    %170 = arith.truncf %168 : vector<8x32xf32> to vector<8x32xbf16>
    %cst_37 = arith.constant dense<0.000000e+00> : vector<8x128xf32>
    %171 = tpu.matmul %170, %12, %cst_37 {dimension_numbers = #tpu.dot_dimension_numbers<[1], [0], [0], [1], [0, 0, 1, 1], [], []>} : vector<8x32xbf16>, vector<32x128xbf16>, vector<8x128xf32> -> vector<8x128xf32>
    %172 = arith.addf %169, %171 : vector<8x128xf32>
    %173 = arith.negf %172 : vector<8x128xf32>
    %174 = math.exp %173 : vector<8x128xf32>
    %cst_38 = arith.constant 1.000000e+00 : f32
    %175 = vector.broadcast %cst_38 : f32 to vector<8x128xf32>
    %176 = arith.addf %175, %174 : vector<8x128xf32>
    %177 = arith.divf %175, %176 : vector<8x128xf32>
    %178 = vector.extract_strided_slice %177 {offsets = [0, 0], sizes = [8, 32], strides = [1, 1]} : vector<8x128xf32> to vector<8x32xf32>
    %179 = vector.extract_strided_slice %177 {offsets = [0, 32], sizes = [8, 32], strides = [1, 1]} : vector<8x128xf32> to vector<8x32xf32>
    %180 = vector.extract_strided_slice %177 {offsets = [0, 64], sizes = [8, 32], strides = [1, 1]} : vector<8x128xf32> to vector<8x32xf32>
    %cst_39 = arith.constant 2.000000e+00 : f32
    %181 = vector.broadcast %cst_39 : f32 to vector<8x32xf32>
    %182 = arith.mulf %181, %180 : vector<8x32xf32>
    %cst_40 = arith.constant 1.000000e+00 : f32
    %183 = vector.broadcast %cst_40 : f32 to vector<8x32xf32>
    %184 = arith.subf %182, %183 : vector<8x32xf32>
    %185 = vector.extract_strided_slice %177 {offsets = [0, 96], sizes = [8, 32], strides = [1, 1]} : vector<8x128xf32> to vector<8x32xf32>
    %186 = arith.mulf %179, %166 : vector<8x32xf32>
    %187 = arith.mulf %178, %184 : vector<8x32xf32>
    %188 = arith.addf %186, %187 : vector<8x32xf32>
    %189 = math.tanh %188 : vector<8x32xf32>
    %190 = arith.mulf %185, %189 : vector<8x32xf32>
    %c0_41 = arith.constant 0 : index
    %c0_42 = arith.constant 0 : index
    %191 = vector.load %arg4[%c0_41, %c0_42] : memref<1x32xf32, #tpu.memory_space<vmem>>, vector<1x32xf32>
    %192 = vector.broadcast %191 : vector<1x32xf32> to vector<8x32xf32>
    %193 = arith.mulf %190, %192 : vector<8x32xf32>
    %cst_43 = arith.constant dense<0.000000e+00> : vector<8xf32>
    %194 = vector.multi_reduction <add>, %193, %cst_43 [1] : vector<8x32xf32> to vector<8xf32>
    %195 = vector.shape_cast %194 : vector<8xf32> to vector<8x1xf32>
    %c0_44 = arith.constant 0 : index
    %c0_45 = arith.constant 0 : index
    %196 = vector.load %arg5[%c0_44, %c0_45] : memref<1x1xf32, #tpu.memory_space<vmem>>, vector<1x1xf32>
    %197 = vector.extract %196[0, 0] : f32 from vector<1x1xf32>
    %198 = vector.broadcast %197 : f32 to vector<8x1xf32>
    %199 = arith.addf %195, %198 : vector<8x1xf32>
    %200 = arith.negf %199 : vector<8x1xf32>
    %201 = math.exp %200 : vector<8x1xf32>
    %cst_46 = arith.constant 1.000000e+00 : f32
    %202 = vector.broadcast %cst_46 : f32 to vector<8x1xf32>
    %203 = arith.addf %202, %201 : vector<8x1xf32>
    %204 = arith.divf %202, %203 : vector<8x1xf32>
    %c0_47 = arith.constant 0 : index
    %c0_48 = arith.constant 0 : index
    %205 = vector.load %arg6[%c0_47, %c0_48] : memref<8x1xf32, #tpu.memory_space<vmem>>, vector<8x1xf32>
    tpu.vector_store %arg6[%c0_47, %c0_48], %204 {strides = array<i32>} : memref<8x1xf32, #tpu.memory_space<vmem>>, vector<8x1xf32>,
    return
  }
}

</mosaic_0001>

<llo_original>
// kernel: hate_speech_forward.1
$region0: #{hate_speech_forward.1}
  #allocation0 [shape = 'u32[]', space=smem, size = 0x4, offset = 0x4, fixed_abs, tag = 'smem constant byte address 0x4 - core index']
  #allocation1 [shape = 'u32[144,128]{1,0:T(1,128)}', space=vmem, size = 0x12000, scoped, tag = 'internal scratch']
  #allocation2 [shape = 'f32[1,1]{1,0:T(1,128)S(1)}', space=vmem, size = 0x200, scoped, tag = 'scoped memory for hate_speech_forward.1']
  %s0 = inlined_call_operand.vmem [shape: s32[64,1], index: 0, kind: input, shape index: {}]
  %s1 = inlined_call_operand.vmem [shape: bf16[16,128], index: 1, kind: input, shape index: {}]
  %s2 = inlined_call_operand.vmem [shape: bf16[32,128], index: 2, kind: input, shape index: {}]
  %s3 = inlined_call_operand.vmem [shape: f32[1,128], index: 3, kind: input, shape index: {}]
  %s4 = inlined_call_operand.vmem [shape: f32[1,32], index: 4, kind: input, shape index: {}]
  %s5 = inlined_call_operand.<no memory space> [shape: f32[1,1], index: 5, kind: input, shape index: {}]
  %s6 = inlined_call_operand.vmem [shape: f32[8,1], index: 6, kind: output, shape index: {}]
  %s7 = sld [smem:[#allocation0]]
  $region34: #{hate_speech_forward.1} parent=0
    _
  %s9 = ssub.s32 1, %s7
  %s10 = scalar_select 0, %s9, %s7
  %v11 = vstv %s5
  %12 = vst [vmem:[#allocation2] sm:$0x1] %v11
  // Predicated region
  $region2: #{hate_speech_forward.1} parent=0 // pred_check
    _
  $region3: #{hate_speech_forward.1} parent=0 // pred_check_branch
    %14 = sbr.rel (0) target = $region5
  $region4: #{hate_speech_forward.1} parent=0 // pred_region
    _
  $region5: #{hate_speech_forward.1} parent=0 // pred_fallthru
    _
  // Predicated region
  $region6: #{hate_speech_forward.1} parent=0 // pred_check
    _
  $region7: #{hate_speech_forward.1} parent=0 // pred_check_branch
    %16 = sbr.rel (0) target = $region9
  $region8: #{hate_speech_forward.1} parent=0 // pred_region
    _
  $region9: #{hate_speech_forward.1} parent=0 // pred_fallthru
    _
  // Predicated region
  $region10: #{hate_speech_forward.1} parent=0 // pred_check
    _
  $region11: #{hate_speech_forward.1} parent=0 // pred_check_branch
    %18 = sbr.rel (0) target = $region13
  $region12: #{hate_speech_forward.1} parent=0 // pred_region
    _
  $region13: #{hate_speech_forward.1} parent=0 // pred_fallthru
    _
  // Predicated region
  $region14: #{hate_speech_forward.1} parent=0 // pred_check
    _
  $region15: #{hate_speech_forward.1} parent=0 // pred_check_branch
    %20 = sbr.rel (0) target = $region17
  $region16: #{hate_speech_forward.1} parent=0 // pred_region
    _
  $region17: #{hate_speech_forward.1} parent=0 // pred_fallthru
    _
  // Predicated region
  $region18: #{hate_speech_forward.1} parent=0 // pred_check
    _
  $region19: #{hate_speech_forward.1} parent=0 // pred_check_branch
    %22 = sbr.rel (0) target = $region21
  $region20: #{hate_speech_forward.1} parent=0 // pred_region
    _
  $region21: #{hate_speech_forward.1} parent=0 // pred_fallthru
    _
  // Predicated region
  $region22: #{hate_speech_forward.1} parent=0 // pred_check
    _
  $region23: #{hate_speech_forward.1} parent=0 // pred_check_branch
    %24 = sbr.rel (0) target = $region25
  $region24: #{hate_speech_forward.1} parent=0 // pred_region
    _
  $region25: #{hate_speech_forward.1} parent=0 // pred_fallthru
    _
  %v26 = vld [vmem:[%s0] sm:$0xff]
  %v27 = vld [vmem:[%s0 + $0x8] sm:$0xff]
  %v28 = vld [vmem:[%s0 + $0x10] sm:$0xff]
  %v29 = vld [vmem:[%s0 + $0x18] sm:$0xff]
  %v30 = vld [vmem:[%s0 + $0x20] sm:$0xff]
  %v31 = vld [vmem:[%s0 + $0x28] sm:$0xff]
  %v32 = vld [vmem:[%s0 + $0x30] sm:$0xff]
  %v33 = vld [vmem:[%s0 + $0x38] sm:$0xff]
  %v34 = vlaneseq
  %v35 = vand.u32 %v34, 127
  %36 = vset.pattern.permute.xlu0 0
  %37 = vperm.xlu0 %36, %v26
  %v38 = vpop.permute.xlu0 %37
  %39 = vset.pattern.permute.xlu0 0
  %40 = vperm.xlu0 %39, %v27
  %v41 = vpop.permute.xlu0 %40
  %42 = vset.pattern.permute.xlu0 0
  %43 = vperm.xlu0 %42, %v28
  %v44 = vpop.permute.xlu0 %43
  %45 = vset.pattern.permute.xlu0 0
  %46 = vperm.xlu0 %45, %v29
  %v47 = vpop.permute.xlu0 %46
  %48 = vset.pattern.permute.xlu0 0
  %49 = vperm.xlu0 %48, %v30
  %v50 = vpop.permute.xlu0 %49
  %51 = vset.pattern.permute.xlu0 0
  %52 = vperm.xlu0 %51, %v31
  %v53 = vpop.permute.xlu0 %52
  %54 = vset.pattern.permute.xlu0 0
  %55 = vperm.xlu0 %54, %v32
  %v56 = vpop.permute.xlu0 %55
  %57 = vset.pattern.permute.xlu0 0
  %58 = vperm.xlu0 %57, %v33
  %v59 = vpop.permute.xlu0 %58
  %vm60 = vcmp.eq.s32.totalorder %v38, %v35
  %vm61 = vcmp.eq.s32.totalorder %v41, %v35
  %vm62 = vcmp.eq.s32.totalorder %v44, %v35
  %vm63 = vcmp.eq.s32.totalorder %v47, %v35
  %vm64 = vcmp.eq.s32.totalorder %v50, %v35
  %vm65 = vcmp.eq.s32.totalorder %v53, %v35
  %vm66 = vcmp.eq.s32.totalorder %v56, %v35
  %vm67 = vcmp.eq.s32.totalorder %v59, %v35
  %v68 = vsel %vm60, 1, 0
  %v69 = vsel %vm61, 1, 0
  %v70 = vsel %vm62, 1, 0
  %v71 = vsel %vm63, 1, 0
  %v72 = vsel %vm64, 1, 0
  %v73 = vsel %vm65, 1, 0
  %v74 = vsel %vm66, 1, 0
  %v75 = vsel %vm67, 1, 0
  %v76 = vcvt.s32.f32 %v68
  %v77 = vcvt.s32.f32 %v69
  %v78 = vcvt.s32.f32 %v70
  %v79 = vcvt.s32.f32 %v71
  %v80 = vcvt.s32.f32 %v72
  %v81 = vcvt.s32.f32 %v73
  %v82 = vcvt.s32.f32 %v74
  %v83 = vcvt.s32.f32 %v75
  %v84 = vpack.c.bf16 %v77, %v76
  %v85 = vpack.c.bf16 %v79, %v78
  %v86 = vpack.c.bf16 %v81, %v80
  %v87 = vpack.c.bf16 %v83, %v82
  %v88 = vld [vmem:[%s1] sm:$0xf]
  %v89 = vld [vmem:[%s1 + $0x4] sm:$0xf]
  %v90 = vld [vmem:[%s3] sm:$0x1]
  %v92 = vlaneseq
  %v93 = vshrl.u32 %v92, 7
  %v94 = vsub.s32 0, %v93
  %v95 = vrot.slane %v90, %v94
  %v99 = vunpack.c.l.b16 %v88
  %v100 = vunpack.c.l.b16 %v89
  %v101 = vpack.c.b16 %v100, %v99
  %vm103 = vcmask 130048
  %v105 = vsel %vm103, %v84, 0
  %v108 = vsel %vm103, %v85, 0
  %v111 = vsel %vm103, %v86, 0
  %v114 = vsel %vm103, %v87, 0
  %116 = vmatprep.subr.bf16.mxu0 0
  %117 = vmatpush1.bf16.msra.mxu0 %v101
  %118 = vmatprep.subr.bf16.mxu0 0
  %119 = vmatpush1.bf16.msra.mxu0 0
  %120 = vmatprep.subr.bf16.mxu0 0
  %121 = vmatpush1.bf16.msra.mxu0 0
  %122 = vmatprep.subr.bf16.mxu0 0
  %123 = vmatpush1.bf16.msra.mxu0 0
  %124 = vmatprep.subr.bf16.mxu0 0
  %125 = vmatpush1.bf16.msra.mxu0 0
  %126 = vmatprep.subr.bf16.mxu0 0
  %127 = vmatpush1.bf16.msra.mxu0 0
  %128 = vmatprep.subr.bf16.mxu0 0
  %129 = vmatpush1.bf16.msra.mxu0 0
  %130 = vmatprep.subr.bf16.mxu0 0
  %131 = vmatpush1.bf16.msra.mxu0 0
  %132 = vmatprep.subr.bf16.mxu0 0
  %133 = vmatpush1.bf16.msra.mxu0 0
  %134 = vmatprep.subr.bf16.mxu0 0
  %135 = vmatpush1.bf16.msra.mxu0 0
  %136 = vmatprep.subr.bf16.mxu0 0
  %137 = vmatpush1.bf16.msra.mxu0 0
  %138 = vmatprep.subr.bf16.mxu0 0
  %139 = vmatpush1.bf16.msra.mxu0 0
  %140 = vmatprep.subr.bf16.mxu0 0
  %141 = vmatpush1.bf16.msra.mxu0 0
  %142 = vmatprep.subr.bf16.mxu0 0
  %143 = vmatpush1.bf16.msra.mxu0 0
  %144 = vmatprep.subr.bf16.mxu0 0
  %145 = vmatpush1.bf16.msra.mxu0 0
  %146 = vmatprep.subr.bf16.mxu0 0
  %147 = vmatpush1.bf16.msra.mxu0 0
  %148 = vmatprep.mubr.bf16.mxu0 0
  %149 = vmatmul.mubr.bf16.gmra.mrb[0].mxu0 %v105
  %v150 = vpop.f32.mrb[0].mxu0
  %v151 = vadd.f32 %v95, %v150
  %v152 = vpop.f32.mrb[0].mxu0
  %v153 = vpop.f32.mrb[0].mxu0
  %v154 = vadd.f32 %v95, %v153
  %v155 = vpop.f32.mrb[0].mxu0
  %156 = vmatprep.mubr.bf16.mxu0 0
  %157 = vmatmul.mubr.bf16.gmra.mrb[0].mxu0 %v108
  %v158 = vpop.f32.mrb[0].mxu0
  %v159 = vadd.f32 %v95, %v158
  %v160 = vpop.f32.mrb[0].mxu0
  %v161 = vpop.f32.mrb[0].mxu0
  %v162 = vadd.f32 %v95, %v161
  %v163 = vpop.f32.mrb[0].mxu0
  %164 = vmatprep.mubr.bf16.mxu0 0
  %165 = vmatmul.mubr.bf16.gmra.mrb[0].mxu0 %v111
  %v166 = vpop.f32.mrb[0].mxu0
  %v167 = vadd.f32 %v95, %v166
  %v168 = vpop.f32.mrb[0].mxu0
  %v169 = vpop.f32.mrb[0].mxu0
  %v170 = vadd.f32 %v95, %v169
  %v171 = vpop.f32.mrb[0].mxu0
  %172 = vmatprep.mubr.bf16.mxu0 0
  %173 = vmatmul.mubr.bf16.gmra.mrb[0].mxu0 %v114
  %v174 = vpop.f32.mrb[0].mxu0
  %v175 = vadd.f32 %v95, %v174
  %v176 = vpop.f32.mrb[0].mxu0
  %v177 = vpop.f32.mrb[0].mxu0
  %v178 = vadd.f32 %v95, %v177
  %v179 = vpop.f32.mrb[0].mxu0
  %180 = vdwg.mxu0
  %v181 = vld [vmem:[%s2] sm:$0xf]
  %v182 = vld [vmem:[%s2 + $0x4] sm:$0xf]
  %v183 = vld [vmem:[%s2 + $0x8] sm:$0xf]
  %v184 = vld [vmem:[%s2 + $0xc] sm:$0xf]
  %v189 = vunpack.c.l.b16 %v181
  %v190 = vunpack.c.l.b16 %v182
  %v191 = vunpack.c.l.b16 %v183
  %v192 = vunpack.c.l.b16 %v184
  %v193 = vpack.c.b16 %v190, %v189
  %v194 = vpack.c.b16 %v192, %v191
  %vm197 = vcmask 261120
  %v199 = vsel %vm197, 0, 0
  %201 = vmatprep.subr.bf16.mxu0 0
  %202 = vmatpush1.bf16.msra.mxu0 %v193
  %203 = vmatprep.subr.bf16.mxu0 0
  %204 = vmatpush1.bf16.msra.mxu0 %v194
  %205 = vmatprep.subr.bf16.mxu0 0
  %206 = vmatpush1.bf16.msra.mxu0 0
  %207 = vmatprep.subr.bf16.mxu0 0
  %208 = vmatpush1.bf16.msra.mxu0 0
  %209 = vmatprep.subr.bf16.mxu0 0
  %210 = vmatpush1.bf16.msra.mxu0 0
  %211 = vmatprep.subr.bf16.mxu0 0
  %212 = vmatpush1.bf16.msra.mxu0 0
  %213 = vmatprep.subr.bf16.mxu0 0
  %214 = vmatpush1.bf16.msra.mxu0 0
  %215 = vmatprep.subr.bf16.mxu0 0
  %216 = vmatpush1.bf16.msra.mxu0 0
  %217 = vmatprep.subr.bf16.mxu0 0
  %218 = vmatpush1.bf16.msra.mxu0 0
  %219 = vmatprep.subr.bf16.mxu0 0
  %220 = vmatpush1.bf16.msra.mxu0 0
  %221 = vmatprep.subr.bf16.mxu0 0
  %222 = vmatpush1.bf16.msra.mxu0 0
  %223 = vmatprep.subr.bf16.mxu0 0
  %224 = vmatpush1.bf16.msra.mxu0 0
  %225 = vmatprep.subr.bf16.mxu0 0
  %226 = vmatpush1.bf16.msra.mxu0 0
  %227 = vmatprep.subr.bf16.mxu0 0
  %228 = vmatpush1.bf16.msra.mxu0 0
  %229 = vmatprep.subr.bf16.mxu0 0
  %230 = vmatpush1.bf16.msra.mxu0 0
  %231 = vmatprep.subr.bf16.mxu0 0
  %232 = vmatpush1.bf16.msra.mxu0 0
  %233 = vmatprep.mubr.bf16.mxu0 0
  %234 = vmatmul.mubr.bf16.gmra.mrb[0].mxu0 %v199
  %v235 = vpop.f32.mrb[0].mxu0
  %v236 = vadd.f32 0.0, %v235
  %v237 = vpop.f32.mrb[0].mxu0
  %v238 = vpop.f32.mrb[0].mxu0
  %v239 = vpop.f32.mrb[0].mxu0
  %240 = vdwg.mxu0
  %v241 = vadd.f32 %v151, %v236
  %v242 = vxor.u32 %v241, 2147483648
  %v243 = vmul.f32 %v242, 1.442695
  %v244 = vpow.pop %v243
  %v245 = vadd.f32 %v244, 1.0
  %v246 = vrcp.pop %v245
  %v247 = vmul.f32 1.0, %v246
  %v248 = vmul.f32 %v247, 2.0
  %v249 = vsub.f32 %v248, 1.0
  %v250 = vmul.f32 %v247, 0.0
  %252 = vrot.lane.b32.xlu0 %v249, 64
  %v253 = vpop.permute.xlu0 %252
  %v255 = vmul.f32 %v247, %v253
  %257 = vrot.lane.b32.xlu0 %v255, 32
  %v258 = vpop.permute.xlu0 %257
  %v260 = vadd.f32 %v250, %v258
  %v261 = vtanh.pop %v260
  %263 = vrot.lane.b32.xlu0 %v261, 64
  %v264 = vpop.permute.xlu0 %263
  %v266 = vmul.f32 %v247, %v264
  %v267 = vpack.c.bf16 %v266, %v266
  %269 = vrot.lane.b32.xlu0 %v267, 32
  %v270 = vpop.permute.xlu0 %269
  %v272 = vsel %vm197, %v270, 0
  %274 = vmatprep.subr.bf16.mxu0 0
  %275 = vmatpush1.bf16.msra.mxu0 %v193
  %276 = vmatprep.subr.bf16.mxu0 0
  %277 = vmatpush1.bf16.msra.mxu0 %v194
  %278 = vmatprep.subr.bf16.mxu0 0
  %279 = vmatpush1.bf16.msra.mxu0 0
  %280 = vmatprep.subr.bf16.mxu0 0
  %281 = vmatpush1.bf16.msra.mxu0 0
  %282 = vmatprep.subr.bf16.mxu0 0
  %283 = vmatpush1.bf16.msra.mxu0 0
  %284 = vmatprep.subr.bf16.mxu0 0
  %285 = vmatpush1.bf16.msra.mxu0 0
  %286 = vmatprep.subr.bf16.mxu0 0
  %287 = vmatpush1.bf16.msra.mxu0 0
  %288 = vmatprep.subr.bf16.mxu0 0
  %289 = vmatpush1.bf16.msra.mxu0 0
  %290 = vmatprep.subr.bf16.mxu0 0
  %291 = vmatpush1.bf16.msra.mxu0 0
  %292 = vmatprep.subr.bf16.mxu0 0
  %293 = vmatpush1.bf16.msra.mxu0 0
  %294 = vmatprep.subr.bf16.mxu0 0
  %295 = vmatpush1.bf16.msra.mxu0 0
  %296 = vmatprep.subr.bf16.mxu0 0
  %297 = vmatpush1.bf16.msra.mxu0 0
  %298 = vmatprep.subr.bf16.mxu0 0
  %299 = vmatpush1.bf16.msra.mxu0 0
  %300 = vmatprep.subr.bf16.mxu0 0
  %301 = vmatpush1.bf16.msra.mxu0 0
  %302 = vmatprep.subr.bf16.mxu0 0
  %303 = vmatpush1.bf16.msra.mxu0 0
  %304 = vmatprep.subr.bf16.mxu0 0
  %305 = vmatpush1.bf16.msra.mxu0 0
  %306 = vmatprep.mubr.bf16.mxu0 0
  %307 = vmatmul.mubr.bf16.gmra.mrb[0].mxu0 %v272
  %v308 = vpop.f32.mrb[0].mxu0
  %v309 = vadd.f32 0.0, %v308
  %v310 = vpop.f32.mrb[0].mxu0
  %v311 = vpop.f32.mrb[0].mxu0
  %v312 = vpop.f32.mrb[0].mxu0
  %313 = vdwg.mxu0
  %v314 = vadd.f32 %v154, %v309
  %v315 = vxor.u32 %v314, 2147483648
  %v316 = vmul.f32 %v315, 1.442695
  %v317 = vpow.pop %v316
  %v318 = vadd.f32 %v317, 1.0
  %v319 = vrcp.pop %v318
  %v320 = vmul.f32 1.0, %v319
  %v321 = vmul.f32 %v320, 2.0
  %v322 = vsub.f32 %v321, 1.0
  %v323 = vmul.f32 %v320, %v260
  %325 = vrot.lane.b32.xlu0 %v322, 64
  %v326 = vpop.permute.xlu0 %325
  %v328 = vmul.f32 %v320, %v326
  %330 = vrot.lane.b32.xlu0 %v328, 32
  %v331 = vpop.permute.xlu0 %330
  %v333 = vadd.f32 %v323, %v331
  %v334 = vtanh.pop %v333
  %336 = vrot.lane.b32.xlu0 %v334, 64
  %v337 = vpop.permute.xlu0 %336
  %v339 = vmul.f32 %v320, %v337
  %v340 = vpack.c.bf16 %v339, %v339
  %342 = vrot.lane.b32.xlu0 %v340, 32
  %v343 = vpop.permute.xlu0 %342
  %v345 = vsel %vm197, %v343, 0
  %347 = vmatprep.subr.bf16.mxu0 0
  %348 = vmatpush1.bf16.msra.mxu0 %v193
  %349 = vmatprep.subr.bf16.mxu0 0
  %350 = vmatpush1.bf16.msra.mxu0 %v194
  %351 = vmatprep.subr.bf16.mxu0 0
  %352 = vmatpush1.bf16.msra.mxu0 0
  %353 = vmatprep.subr.bf16.mxu0 0
  %354 = vmatpush1.bf16.msra.mxu0 0
  %355 = vmatprep.subr.bf16.mxu0 0
  %356 = vmatpush1.bf16.msra.mxu0 0
  %357 = vmatprep.subr.bf16.mxu0 0
  %358 = vmatpush1.bf16.msra.mxu0 0
  %359 = vmatprep.subr.bf16.mxu0 0
  %360 = vmatpush1.bf16.msra.mxu0 0
  %361 = vmatprep.subr.bf16.mxu0 0
  %362 = vmatpush1.bf16.msra.mxu0 0
  %363 = vmatprep.subr.bf16.mxu0 0
  %364 = vmatpush1.bf16.msra.mxu0 0
  %365 = vmatprep.subr.bf16.mxu0 0
  %366 = vmatpush1.bf16.msra.mxu0 0
  %367 = vmatprep.subr.bf16.mxu0 0
  %368 = vmatpush1.bf16.msra.mxu0 0
  %369 = vmatprep.subr.bf16.mxu0 0
  %370 = vmatpush1.bf16.msra.mxu0 0
  %371 = vmatprep.subr.bf16.mxu0 0
  %372 = vmatpush1.bf16.msra.mxu0 0
  %373 = vmatprep.subr.bf16.mxu0 0
  %374 = vmatpush1.bf16.msra.mxu0 0
  %375 = vmatprep.subr.bf16.mxu0 0
  %376 = vmatpush1.bf16.msra.mxu0 0
  %377 = vmatprep.subr.bf16.mxu0 0
  %378 = vmatpush1.bf16.msra.mxu0 0
  %379 = vmatprep.mubr.bf16.mxu0 0
  %380 = vmatmul.mubr.bf16.gmra.mrb[0].mxu0 %v345
  %v381 = vpop.f32.mrb[0].mxu0
  %v382 = vadd.f32 0.0, %v381
  %v383 = vpop.f32.mrb[0].mxu0
  %v384 = vpop.f32.mrb[0].mxu0
  %v385 = vpop.f32.mrb[0].mxu0
  %386 = vdwg.mxu0
  %v387 = vadd.f32 %v159, %v382
  %v388 = vxor.u32 %v387, 2147483648
  %v389 = vmul.f32 %v388, 1.442695
  %v390 = vpow.pop %v389
  %v391 = vadd.f32 %v390, 1.0
  %v392 = vrcp.pop %v391
  %v393 = vmul.f32 1.0, %v392
  %v394 = vmul.f32 %v393, 2.0
  %v395 = vsub.f32 %v394, 1.0
  %v396 = vmul.f32 %v393, %v333
  %398 = vrot.lane.b32.xlu0 %v395, 64
  %v399 = vpop.permute.xlu0 %398
  %v401 = vmul.f32 %v393, %v399
  %403 = vrot.lane.b32.xlu0 %v401, 32
  %v404 = vpop.permute.xlu0 %403
  %v406 = vadd.f32 %v396, %v404
  %v407 = vtanh.pop %v406
  %409 = vrot.lane.b32.xlu0 %v407, 64
  %v410 = vpop.permute.xlu0 %409
  %v412 = vmul.f32 %v393, %v410
  %v413 = vpack.c.bf16 %v412, %v412
  %415 = vrot.lane.b32.xlu0 %v413, 32
  %v416 = vpop.permute.xlu0 %415
  %v418 = vsel %vm197, %v416, 0
  %420 = vmatprep.subr.bf16.mxu0 0
  %421 = vmatpush1.bf16.msra.mxu0 %v193
  %422 = vmatprep.subr.bf16.mxu0 0
  %423 = vmatpush1.bf16.msra.mxu0 %v194
  %424 = vmatprep.subr.bf16.mxu0 0
  %425 = vmatpush1.bf16.msra.mxu0 0
  %426 = vmatprep.subr.bf16.mxu0 0
  %427 = vmatpush1.bf16.msra.mxu0 0
  %428 = vmatprep.subr.bf16.mxu0 0
  %429 = vmatpush1.bf16.msra.mxu0 0
  %430 = vmatprep.subr.bf16.mxu0 0
  %431 = vmatpush1.bf16.msra.mxu0 0
  %432 = vmatprep.subr.bf16.mxu0 0
  %433 = vmatpush1.bf16.msra.mxu0 0
  %434 = vmatprep.subr.bf16.mxu0 0
  %435 = vmatpush1.bf16.msra.mxu0 0
  %436 = vmatprep.subr.bf16.mxu0 0
  %437 = vmatpush1.bf16.msra.mxu0 0
  %438 = vmatprep.subr.bf16.mxu0 0
  %439 = vmatpush1.bf16.msra.mxu0 0
  %440 = vmatprep.subr.bf16.mxu0 0
  %441 = vmatpush1.bf16.msra.mxu0 0
  %442 = vmatprep.subr.bf16.mxu0 0
  %443 = vmatpush1.bf16.msra.mxu0 0
  %444 = vmatprep.subr.bf16.mxu0 0
  %445 = vmatpush1.bf16.msra.mxu0 0
  %446 = vmatprep.subr.bf16.mxu0 0
  %447 = vmatpush1.bf16.msra.mxu0 0
  %448 = vmatprep.subr.bf16.mxu0 0
  %449 = vmatpush1.bf16.msra.mxu0 0
  %450 = vmatprep.subr.bf16.mxu0 0
  %451 = vmatpush1.bf16.msra.mxu0 0
  %452 = vmatprep.mubr.bf16.mxu0 0
  %453 = vmatmul.mubr.bf16.gmra.mrb[0].mxu0 %v418
  %v454 = vpop.f32.mrb[0].mxu0
  %v455 = vadd.f32 0.0, %v454
  %v456 = vpop.f32.mrb[0].mxu0
  %v457 = vpop.f32.mrb[0].mxu0
  %v458 = vpop.f32.mrb[0].mxu0
  %459 = vdwg.mxu0
  %v460 = vadd.f32 %v162, %v455
  %v461 = vxor.u32 %v460, 2147483648
  %v462 = vmul.f32 %v461, 1.442695
  %v463 = vpow.pop %v462
  %v464 = vadd.f32 %v463, 1.0
  %v465 = vrcp.pop %v464
  %v466 = vmul.f32 1.0, %v465
  %v467 = vmul.f32 %v466, 2.0
  %v468 = vsub.f32 %v467, 1.0
  %v469 = vmul.f32 %v466, %v406
  %471 = vrot.lane.b32.xlu0 %v468, 64
  %v472 = vpop.permute.xlu0 %471
  %v474 = vmul.f32 %v466, %v472
  %476 = vrot.lane.b32.xlu0 %v474, 32
  %v477 = vpop.permute.xlu0 %476
  %v479 = vadd.f32 %v469, %v477
  %v480 = vtanh.pop %v479
  %482 = vrot.lane.b32.xlu0 %v480, 64
  %v483 = vpop.permute.xlu0 %482
  %v485 = vmul.f32 %v466, %v483
  %v486 = vpack.c.bf16 %v485, %v485
  %488 = vrot.lane.b32.xlu0 %v486, 32
  %v489 = vpop.permute.xlu0 %488
  %v491 = vsel %vm197, %v489, 0
  %493 = vmatprep.subr.bf16.mxu0 0
  %494 = vmatpush1.bf16.msra.mxu0 %v193
  %495 = vmatprep.subr.bf16.mxu0 0
  %496 = vmatpush1.bf16.msra.mxu0 %v194
  %497 = vmatprep.subr.bf16.mxu0 0
  %498 = vmatpush1.bf16.msra.mxu0 0
  %499 = vmatprep.subr.bf16.mxu0 0
  %500 = vmatpush1.bf16.msra.mxu0 0
  %501 = vmatprep.subr.bf16.mxu0 0
  %502 = vmatpush1.bf16.msra.mxu0 0
  %503 = vmatprep.subr.bf16.mxu0 0
  %504 = vmatpush1.bf16.msra.mxu0 0
  %505 = vmatprep.subr.bf16.mxu0 0
  %506 = vmatpush1.bf16.msra.mxu0 0
  %507 = vmatprep.subr.bf16.mxu0 0
  %508 = vmatpush1.bf16.msra.mxu0 0
  %509 = vmatprep.subr.bf16.mxu0 0
  %510 = vmatpush1.bf16.msra.mxu0 0
  %511 = vmatprep.subr.bf16.mxu0 0
  %512 = vmatpush1.bf16.msra.mxu0 0
  %513 = vmatprep.subr.bf16.mxu0 0
  %514 = vmatpush1.bf16.msra.mxu0 0
  %515 = vmatprep.subr.bf16.mxu0 0
  %516 = vmatpush1.bf16.msra.mxu0 0
  %517 = vmatprep.subr.bf16.mxu0 0
  %518 = vmatpush1.bf16.msra.mxu0 0
  %519 = vmatprep.subr.bf16.mxu0 0
  %520 = vmatpush1.bf16.msra.mxu0 0
  %521 = vmatprep.subr.bf16.mxu0 0
  %522 = vmatpush1.bf16.msra.mxu0 0
  %523 = vmatprep.subr.bf16.mxu0 0
  %524 = vmatpush1.bf16.msra.mxu0 0
  %525 = vmatprep.mubr.bf16.mxu0 0
  %526 = vmatmul.mubr.bf16.gmra.mrb[0].mxu0 %v491
  %v527 = vpop.f32.mrb[0].mxu0
  %v528 = vadd.f32 0.0, %v527
  %v529 = vpop.f32.mrb[0].mxu0
  %v530 = vpop.f32.mrb[0].mxu0
  %v531 = vpop.f32.mrb[0].mxu0
  %532 = vdwg.mxu0
  %v533 = vadd.f32 %v167, %v528
  %v534 = vxor.u32 %v533, 2147483648
  %v535 = vmul.f32 %v534, 1.442695
  %v536 = vpow.pop %v535
  %v537 = vadd.f32 %v536, 1.0
  %v538 = vrcp.pop %v537
  %v539 = vmul.f32 1.0, %v538
  %v540 = vmul.f32 %v539, 2.0
  %v541 = vsub.f32 %v540, 1.0
  %v542 = vmul.f32 %v539, %v479
  %544 = vrot.lane.b32.xlu0 %v541, 64
  %v545 = vpop.permute.xlu0 %544
  %v547 = vmul.f32 %v539, %v545
  %549 = vrot.lane.b32.xlu0 %v547, 32
  %v550 = vpop.permute.xlu0 %549
  %v552 = vadd.f32 %v542, %v550
  %v553 = vtanh.pop %v552
  %555 = vrot.lane.b32.xlu0 %v553, 64
  %v556 = vpop.permute.xlu0 %555
  %v558 = vmul.f32 %v539, %v556
  %v559 = vpack.c.bf16 %v558, %v558
  %561 = vrot.lane.b32.xlu0 %v559, 32
  %v562 = vpop.permute.xlu0 %561
  %v564 = vsel %vm197, %v562, 0
  %566 = vmatprep.subr.bf16.mxu0 0
  %567 = vmatpush1.bf16.msra.mxu0 %v193
  %568 = vmatprep.subr.bf16.mxu0 0
  %569 = vmatpush1.bf16.msra.mxu0 %v194
  %570 = vmatprep.subr.bf16.mxu0 0
  %571 = vmatpush1.bf16.msra.mxu0 0
  %572 = vmatprep.subr.bf16.mxu0 0
  %573 = vmatpush1.bf16.msra.mxu0 0
  %574 = vmatprep.subr.bf16.mxu0 0
  %575 = vmatpush1.bf16.msra.mxu0 0
  %576 = vmatprep.subr.bf16.mxu0 0
  %577 = vmatpush1.bf16.msra.mxu0 0
  %578 = vmatprep.subr.bf16.mxu0 0
  %579 = vmatpush1.bf16.msra.mxu0 0
  %580 = vmatprep.subr.bf16.mxu0 0
  %581 = vmatpush1.bf16.msra.mxu0 0
  %582 = vmatprep.subr.bf16.mxu0 0
  %583 = vmatpush1.bf16.msra.mxu0 0
  %584 = vmatprep.subr.bf16.mxu0 0
  %585 = vmatpush1.bf16.msra.mxu0 0
  %586 = vmatprep.subr.bf16.mxu0 0
  %587 = vmatpush1.bf16.msra.mxu0 0
  %588 = vmatprep.subr.bf16.mxu0 0
  %589 = vmatpush1.bf16.msra.mxu0 0
  %590 = vmatprep.subr.bf16.mxu0 0
  %591 = vmatpush1.bf16.msra.mxu0 0
  %592 = vmatprep.subr.bf16.mxu0 0
  %593 = vmatpush1.bf16.msra.mxu0 0
  %594 = vmatprep.subr.bf16.mxu0 0
  %595 = vmatpush1.bf16.msra.mxu0 0
  %596 = vmatprep.subr.bf16.mxu0 0
  %597 = vmatpush1.bf16.msra.mxu0 0
  %598 = vmatprep.mubr.bf16.mxu0 0
  %599 = vmatmul.mubr.bf16.gmra.mrb[0].mxu0 %v564
  %v600 = vpop.f32.mrb[0].mxu0
  %v601 = vadd.f32 0.0, %v600
  %v602 = vpop.f32.mrb[0].mxu0
  %v603 = vpop.f32.mrb[0].mxu0
  %v604 = vpop.f32.mrb[0].mxu0
  %605 = vdwg.mxu0
  %v606 = vadd.f32 %v170, %v601
  %v607 = vxor.u32 %v606, 2147483648
  %v608 = vmul.f32 %v607, 1.442695
  %v609 = vpow.pop %v608
  %v610 = vadd.f32 %v609, 1.0
  %v611 = vrcp.pop %v610
  %v612 = vmul.f32 1.0, %v611
  %v613 = vmul.f32 %v612, 2.0
  %v614 = vsub.f32 %v613, 1.0
  %v615 = vmul.f32 %v612, %v552
  %617 = vrot.lane.b32.xlu0 %v614, 64
  %v618 = vpop.permute.xlu0 %617
  %v620 = vmul.f32 %v612, %v618
  %622 = vrot.lane.b32.xlu0 %v620, 32
  %v623 = vpop.permute.xlu0 %622
  %v625 = vadd.f32 %v615, %v623
  %v626 = vtanh.pop %v625
  %628 = vrot.lane.b32.xlu0 %v626, 64
  %v629 = vpop.permute.xlu0 %628
  %v631 = vmul.f32 %v612, %v629
  %v632 = vpack.c.bf16 %v631, %v631
  %634 = vrot.lane.b32.xlu0 %v632, 32
  %v635 = vpop.permute.xlu0 %634
  %v637 = vsel %vm197, %v635, 0
  %639 = vmatprep.subr.bf16.mxu0 0
  %640 = vmatpush1.bf16.msra.mxu0 %v193
  %641 = vmatprep.subr.bf16.mxu0 0
  %642 = vmatpush1.bf16.msra.mxu0 %v194
  %643 = vmatprep.subr.bf16.mxu0 0
  %644 = vmatpush1.bf16.msra.mxu0 0
  %645 = vmatprep.subr.bf16.mxu0 0
  %646 = vmatpush1.bf16.msra.mxu0 0
  %647 = vmatprep.subr.bf16.mxu0 0
  %648 = vmatpush1.bf16.msra.mxu0 0
  %649 = vmatprep.subr.bf16.mxu0 0
  %650 = vmatpush1.bf16.msra.mxu0 0
  %651 = vmatprep.subr.bf16.mxu0 0
  %652 = vmatpush1.bf16.msra.mxu0 0
  %653 = vmatprep.subr.bf16.mxu0 0
  %654 = vmatpush1.bf16.msra.mxu0 0
  %655 = vmatprep.subr.bf16.mxu0 0
  %656 = vmatpush1.bf16.msra.mxu0 0
  %657 = vmatprep.subr.bf16.mxu0 0
  %658 = vmatpush1.bf16.msra.mxu0 0
  %659 = vmatprep.subr.bf16.mxu0 0
  %660 = vmatpush1.bf16.msra.mxu0 0
  %661 = vmatprep.subr.bf16.mxu0 0
  %662 = vmatpush1.bf16.msra.mxu0 0
  %663 = vmatprep.subr.bf16.mxu0 0
  %664 = vmatpush1.bf16.msra.mxu0 0
  %665 = vmatprep.subr.bf16.mxu0 0
  %666 = vmatpush1.bf16.msra.mxu0 0
  %667 = vmatprep.subr.bf16.mxu0 0
  %668 = vmatpush1.bf16.msra.mxu0 0
  %669 = vmatprep.subr.bf16.mxu0 0
  %670 = vmatpush1.bf16.msra.mxu0 0
  %671 = vmatprep.mubr.bf16.mxu0 0
  %672 = vmatmul.mubr.bf16.gmra.mrb[0].mxu0 %v637
  %v673 = vpop.f32.mrb[0].mxu0
  %v674 = vadd.f32 0.0, %v673
  %v675 = vpop.f32.mrb[0].mxu0
  %v676 = vpop.f32.mrb[0].mxu0
  %v677 = vpop.f32.mrb[0].mxu0
  %678 = vdwg.mxu0
  %v679 = vadd.f32 %v175, %v674
  %v680 = vxor.u32 %v679, 2147483648
  %v681 = vmul.f32 %v680, 1.442695
  %v682 = vpow.pop %v681
  %v683 = vadd.f32 %v682, 1.0
  %v684 = vrcp.pop %v683
  %v685 = vmul.f32 1.0, %v684
  %v686 = vmul.f32 %v685, 2.0
  %v687 = vsub.f32 %v686, 1.0
  %v688 = vmul.f32 %v685, %v625
  %690 = vrot.lane.b32.xlu0 %v687, 64
  %v691 = vpop.permute.xlu0 %690
  %v693 = vmul.f32 %v685, %v691
  %695 = vrot.lane.b32.xlu0 %v693, 32
  %v696 = vpop.permute.xlu0 %695
  %v698 = vadd.f32 %v688, %v696
  %v699 = vtanh.pop %v698
  %701 = vrot.lane.b32.xlu0 %v699, 64
  %v702 = vpop.permute.xlu0 %701
  %v704 = vmul.f32 %v685, %v702
  %v705 = vpack.c.bf16 %v704, %v704
  %707 = vrot.lane.b32.xlu0 %v705, 32
  %v708 = vpop.permute.xlu0 %707
  %v710 = vsel %vm197, %v708, 0
  %712 = vmatprep.subr.bf16.mxu0 0
  %713 = vmatpush1.bf16.msra.mxu0 %v193
  %714 = vmatprep.subr.bf16.mxu0 0
  %715 = vmatpush1.bf16.msra.mxu0 %v194
  %716 = vmatprep.subr.bf16.mxu0 0
  %717 = vmatpush1.bf16.msra.mxu0 0
  %718 = vmatprep.subr.bf16.mxu0 0
  %719 = vmatpush1.bf16.msra.mxu0 0
  %720 = vmatprep.subr.bf16.mxu0 0
  %721 = vmatpush1.bf16.msra.mxu0 0
  %722 = vmatprep.subr.bf16.mxu0 0
  %723 = vmatpush1.bf16.msra.mxu0 0
  %724 = vmatprep.subr.bf16.mxu0 0
  %725 = vmatpush1.bf16.msra.mxu0 0
  %726 = vmatprep.subr.bf16.mxu0 0
  %727 = vmatpush1.bf16.msra.mxu0 0
  %728 = vmatprep.subr.bf16.mxu0 0
  %729 = vmatpush1.bf16.msra.mxu0 0
  %730 = vmatprep.subr.bf16.mxu0 0
  %731 = vmatpush1.bf16.msra.mxu0 0
  %732 = vmatprep.subr.bf16.mxu0 0
  %733 = vmatpush1.bf16.msra.mxu0 0
  %734 = vmatprep.subr.bf16.mxu0 0
  %735 = vmatpush1.bf16.msra.mxu0 0
  %736 = vmatprep.subr.bf16.mxu0 0
  %737 = vmatpush1.bf16.msra.mxu0 0
  %738 = vmatprep.subr.bf16.mxu0 0
  %739 = vmatpush1.bf16.msra.mxu0 0
  %740 = vmatprep.subr.bf16.mxu0 0
  %741 = vmatpush1.bf16.msra.mxu0 0
  %742 = vmatprep.subr.bf16.mxu0 0
  %743 = vmatpush1.bf16.msra.mxu0 0
  %744 = vmatprep.mubr.bf16.mxu0 0
  %745 = vmatmul.mubr.bf16.gmra.mrb[0].mxu0 %v710
  %v746 = vpop.f32.mrb[0].mxu0
  %v747 = vadd.f32 0.0, %v746
  %v748 = vpop.f32.mrb[0].mxu0
  %v749 = vpop.f32.mrb[0].mxu0
  %v750 = vpop.f32.mrb[0].mxu0
  %751 = vdwg.mxu0
  %v752 = vadd.f32 %v178, %v747
  %v753 = vxor.u32 %v752, 2147483648
  %v754 = vmul.f32 %v753, 1.442695
  %v755 = vpow.pop %v754
  %v756 = vadd.f32 %v755, 1.0
  %v757 = vrcp.pop %v756
  %v758 = vmul.f32 1.0, %v757
  %v759 = vmul.f32 %v758, 2.0
  %v760 = vsub.f32 %v759, 1.0
  %v761 = vmul.f32 %v758, %v698
  %763 = vrot.lane.b32.xlu0 %v760, 64
  %v764 = vpop.permute.xlu0 %763
  %v766 = vmul.f32 %v758, %v764
  %768 = vrot.lane.b32.xlu0 %v766, 32
  %v769 = vpop.permute.xlu0 %768
  %v771 = vadd.f32 %v761, %v769
  %v772 = vtanh.pop %v771
  %774 = vrot.lane.b32.xlu0 %v772, 64
  %v775 = vpop.permute.xlu0 %774
  %v777 = vmul.f32 %v758, %v775
  %v778 = vld [vmem:[%s4] sm:$0x1]
  %v780 = vlaneseq
  %v781 = vshrl.u32 %v780, 7
  %v782 = vsub.s32 0, %v781
  %v783 = vrot.slane %v778, %v782
  %784 = vrot.lane.b32.xlu0 %v783, 96
  %v785 = vpop.permute.xlu0 %784
  %v787 = vmul.f32 %v777, %v785
  %789 = vrot.lane.b32.xlu0 %v787, 32
  %v790 = vpop.permute.xlu0 %789
  %v792 = vsel %vm197, %v790, 0.0
  %793 = vadd.xlane.f32.xlu0 %v792
  %v794 = vpop.xlane.xlu0 %793
  %v795 = vld [vmem:[#allocation2] sm:$0x1]
  %s796 = vtos %v795
  %v797 = vstv %s796
  %v798 = vadd.f32 %v794, %v797
  %v799 = vxor.u32 %v798, 2147483648
  %v800 = vmul.f32 %v799, 1.442695
  %v801 = vpow.pop %v800
  %v802 = vadd.f32 %v801, 1.0
  %v803 = vrcp.pop %v802
  %v804 = vmul.f32 1.0, %v803
  %vm805 = vcmask 7168
  %806 = vst.msk [vmem:[%s6] sm:$0xff] %vm805, %v804
  // Predicated region
  $region26: #{hate_speech_forward.1} parent=0 // pred_check
    _
  $region27: #{hate_speech_forward.1} parent=0 // pred_check_branch
    %808 = sbr.rel (0) target = $region29
  $region28: #{hate_speech_forward.1} parent=0 // pred_region
    _
  $region29: #{hate_speech_forward.1} parent=0 // pred_fallthru
    _
  // Predicated region
  $region30: #{hate_speech_forward.1} parent=0 // pred_check
    _
  $region31: #{hate_speech_forward.1} parent=0 // pred_check_branch
    %810 = sbr.rel (0) target = $region33
  $region32: #{hate_speech_forward.1} parent=0 // pred_region
    _
  $region33: #{hate_speech_forward.1} parent=0 // pred_fallthru
    _

</llo_original>
